<compile_context>
chip_gen: v5e
topology: v5e:2x2
jax: 0.10.0
libtpu: 0.0.40
codegen_flags: <defaults>
</compile_context>

<pallas_src>
import jax
import jax.numpy as jnp
from jax.experimental import pallas as pl
from jax.experimental.pallas import tpu as pltpu

# Small, CartPole-like problem sizes (same semantics as the PyTorch Net).
N_STATES = 4      # env.observation_space.shape[0]
N_ACTIONS = 2     # env.action_space.n
HIDDEN = 10

LANE = 128        # TPU vreg lane width
SUB = 8           # TPU vreg sublane width

BATCH = 32        # typical DQN minibatch; kept small per the harness spec

# Row offsets inside the packed (PARAM_ROWS, 128) parameter slab.  Every
# offset is a multiple of 8 so all in-kernel slices are sublane-tile aligned.
W1_ROW = 0                        # rows [0, 8):    w1 (N_STATES x HIDDEN valid)
B1_ROW = SUB                      # rows [8, 16):   b1 in row 8, lanes [0, HIDDEN)
W2_ROW = 2 * SUB                  # rows [16, 144): w2 (HIDDEN rows x N_ACTIONS lanes valid)
B2_ROW = 2 * SUB + LANE           # rows [144,152): b2 in row 144, lanes [0, N_ACTIONS)
PARAM_ROWS = 2 * SUB + LANE + SUB  # 152


def net_kernel(x_ref, p_ref, out_ref):
    x = x_ref[...]                             # (B, N_STATES) f32
    w1 = p_ref[W1_ROW:W1_ROW + N_STATES, :]    # (N_STATES, 128); lanes >= HIDDEN are 0
    b1 = p_ref[B1_ROW:B1_ROW + 1, :]           # (1, 128); lanes >= HIDDEN are 0
    w2 = p_ref[W2_ROW:W2_ROW + LANE, :]        # (128, 128); rows >= HIDDEN and lanes >= N_ACTIONS are 0
    b2 = p_ref[B2_ROW:B2_ROW + 1, :]           # (1, 128); lanes >= N_ACTIONS are 0

    # fc1 + ReLU on the MXU.  Zero-padded weight/bias lanes keep h's lanes
    # >= HIDDEN exactly 0 through the ReLU.
    h = jnp.maximum(
        jnp.dot(x, w1, preferred_element_type=jnp.float32) + b1, 0.0)   # (B, 128)

    # Output head: contraction over all 128 lanes is exact because both h's
    # padded lanes and w2's padded rows are 0.
    y = jnp.dot(h, w2, preferred_element_type=jnp.float32)              # (B, 128)

    # Store only the real action values -> narrow (B, N_ACTIONS) output,
    # no padded slab and no wrapper slice afterwards.
    out_ref[...] = y[:, :N_ACTIONS] + b2[:, :N_ACTIONS]
    # NOTE: an easy further fusion (per review) is to also emit argmax(y) as a
    # second output to fold greedy-action selection into this same launch.


def pack_params(w1, b1, w2, b2):
    """One-time packing of all parameters into a single lane-dense (152, 128)
    f32 slab (call at init / after each optimizer step, NOT per forward)."""
    p = jnp.zeros((PARAM_ROWS, LANE), jnp.float32)
    p = p.at[W1_ROW:W1_ROW + N_STATES, :HIDDEN].set(w1)        # (4, 10)
    p = p.at[B1_ROW, :HIDDEN].set(b1)                          # (10,)
    p = p.at[W2_ROW:W2_ROW + HIDDEN, :N_ACTIONS].set(w2)       # (10, 2)
    p = p.at[B2_ROW, :N_ACTIONS].set(b2)                       # (2,)
    return p


def net_forward(x, packed_params):
    """x: (B, N_STATES) f32; packed_params: (152, 128) f32 from pack_params.
    Returns action values of shape (B, N_ACTIONS)."""
    B = x.shape[0]
    # Whole problem (a few KiB) fits a single VMEM block on every TPU
    # generation, so there is no grid at all: one launch, one DMA per operand.
    # (Re-introduce a batch grid only for batches of many thousands of rows.)
    return pl.pallas_call(
        net_kernel,
        out_shape=jax.ShapeDtypeStruct((B, N_ACTIONS), jnp.float32),
        in_specs=[
            pl.BlockSpec(memory_space=pltpu.MemorySpace.VMEM),   # x
            pl.BlockSpec(memory_space=pltpu.MemorySpace.VMEM),   # packed params
        ],
        out_specs=pl.BlockSpec(memory_space=pltpu.MemorySpace.VMEM),
    )(x, packed_params)


def init_params(key):
    k1, k2, k3, k4 = jax.random.split(key, 4)
    # PyTorch: weight.data.normal_(0, 0.1); biases keep the default Linear init
    # (uniform in [-1/sqrt(fan_in), 1/sqrt(fan_in)]).
    w1 = 0.1 * jax.random.normal(k1, (N_STATES, HIDDEN), dtype=jnp.float32)
    b1 = jax.random.uniform(
        k2, (HIDDEN,), dtype=jnp.float32,
        minval=-1.0 / jnp.sqrt(N_STATES), maxval=1.0 / jnp.sqrt(N_STATES))
    w2 = 0.1 * jax.random.normal(k3, (HIDDEN, N_ACTIONS), dtype=jnp.float32)
    b2 = jax.random.uniform(
        k4, (N_ACTIONS,), dtype=jnp.float32,
        minval=-1.0 / jnp.sqrt(HIDDEN), maxval=1.0 / jnp.sqrt(HIDDEN))
    return w1, b1, w2, b2


if __name__ == "__main__":
    key = jax.random.PRNGKey(0)
    kx, kp = jax.random.split(key)
    x = jax.random.normal(kx, (BATCH, N_STATES), dtype=jnp.float32)
    w1, b1, w2, b2 = init_params(kp)

    # Padding/packing happens ONCE here, outside the forward path.
    params = pack_params(w1, b1, w2, b2)

    fwd = jax.jit(net_forward)
    out = jax.block_until_ready(fwd(x, params))

    # Pure-JAX reference check (same forward semantics as the PyTorch Net).
    ref = jnp.maximum(x @ w1 + b1, 0.0) @ w2 + b2
    assert out.shape == (BATCH, N_ACTIONS)
    assert jnp.allclose(out, ref, atol=1e-5, rtol=1e-5)

    print("KERNEL_OK")
</pallas_src>

<mosaic_0001>
module attributes {stable_mosaic.version = 11 : i64} {
  func.func @net_kernel(%arg0: memref<32x4xf32, #tpu.memory_space<vmem>>, %arg1: memref<152x128xf32, #tpu.memory_space<vmem>>, %arg2: memref<32x2xf32, #tpu.memory_space<vmem>>) attributes {dimension_semantics = [], scalar_prefetch = 0 : i64, scratch_operands = 0 : i64, tpu.core_type = #tpu.core_type<tc>} {
    %c0 = arith.constant 0 : index
    %c0_0 = arith.constant 0 : index
    %0 = vector.load %arg0[%c0, %c0_0] : memref<32x4xf32, #tpu.memory_space<vmem>>, vector<32x4xf32>
    %c0_1 = arith.constant 0 : index
    %c0_2 = arith.constant 0 : index
    %1 = vector.load %arg1[%c0_1, %c0_2] : memref<152x128xf32, #tpu.memory_space<vmem>>, vector<4x128xf32>
    %c8 = arith.constant 8 : index
    %c0_3 = arith.constant 0 : index
    %2 = vector.load %arg1[%c8, %c0_3] : memref<152x128xf32, #tpu.memory_space<vmem>>, vector<1x128xf32>
    %c16 = arith.constant 16 : index
    %c0_4 = arith.constant 0 : index
    %3 = vector.load %arg1[%c16, %c0_4] : memref<152x128xf32, #tpu.memory_space<vmem>>, vector<128x128xf32>
    %c144 = arith.constant 144 : index
    %c0_5 = arith.constant 0 : index
    %4 = vector.load %arg1[%c144, %c0_5] : memref<152x128xf32, #tpu.memory_space<vmem>>, vector<1x128xf32>
    %cst = arith.constant dense<0.000000e+00> : vector<32x128xf32>
    %5 = tpu.matmul %0, %1, %cst {dimension_numbers = #tpu.dot_dimension_numbers<[1], [0], [0], [1], [0, 0, 1, 1], [], []>} : vector<32x4xf32>, vector<4x128xf32>, vector<32x128xf32> -> vector<32x128xf32>
    %6 = vector.broadcast %2 : vector<1x128xf32> to vector<32x128xf32>
    %7 = arith.addf %5, %6 : vector<32x128xf32>
    %cst_6 = arith.constant 0.000000e+00 : f32
    %8 = vector.broadcast %cst_6 : f32 to vector<32x128xf32>
    %9 = arith.maximumf %7, %8 : vector<32x128xf32>
    %cst_7 = arith.constant dense<0.000000e+00> : vector<32x128xf32>
    %10 = tpu.matmul %9, %3, %cst_7 {dimension_numbers = #tpu.dot_dimension_numbers<[1], [0], [0], [1], [0, 0, 1, 1], [], []>} : vector<32x128xf32>, vector<128x128xf32>, vector<32x128xf32> -> vector<32x128xf32>
    %11 = vector.extract_strided_slice %10 {offsets = [0, 0], sizes = [32, 2], strides = [1, 1]} : vector<32x128xf32> to vector<32x2xf32>
    %12 = vector.extract_strided_slice %4 {offsets = [0, 0], sizes = [1, 2], strides = [1, 1]} : vector<1x128xf32> to vector<1x2xf32>
    %13 = vector.broadcast %12 : vector<1x2xf32> to vector<32x2xf32>
    %14 = arith.addf %11, %13 : vector<32x2xf32>
    %c0_8 = arith.constant 0 : index
    %c0_9 = arith.constant 0 : index
    %15 = vector.load %arg2[%c0_8, %c0_9] : memref<32x2xf32, #tpu.memory_space<vmem>>, vector<32x2xf32>
    tpu.vector_store %arg2[%c0_8, %c0_9], %14 {strides = array<i32>} : memref<32x2xf32, #tpu.memory_space<vmem>>, vector<32x2xf32>,
    return
  }
}

</mosaic_0001>

<llo_original>
// kernel: net_forward.1
$region0: #{net_forward.1}
  #allocation0 [shape = 'u32[]', space=smem, size = 0x4, offset = 0x4, fixed_abs, tag = 'smem constant byte address 0x4 - core index']
  #allocation1 [shape = 'u32[72,128]{1,0:T(1,128)}', space=vmem, size = 0x9000, scoped, tag = 'internal scratch']
  %s0 = inlined_call_operand.vmem [shape: f32[32,4], index: 0, kind: input, shape index: {}]
  %s1 = inlined_call_operand.hbm [shape: f32[152,128], index: 1, kind: input, shape index: {}]
  %s2 = inlined_call_operand.vmem [shape: f32[32,2], index: 2, kind: output, shape index: {}]
  %s3 = sld [smem:[#allocation0]]
  $region22: #{net_forward.1} parent=0
    _
  %s5 = ssub.s32 1, %s3
  %s6 = scalar_select 0, %s5, %s3
  $region1: #{net_forward.1} parent=0
    #allocation2 [shape = 'u8[77824]{0}', space=vmem, size = 0x13000, scoped, tag = 'input window, operand 1, single buffered']
    #allocation3 [shape = 's32[1]{0}', space=sflag, size = 0x4, scoped, tag = 'scoped memory for net_forward.1']
    %7 = vsyncpa [#allocation3], 0
    // Predicated region
    $region2: #{net_forward.1} parent=1 // pred_check
      _
    $region3: #{net_forward.1} parent=1 // pred_check_branch
      %9 = sbr.rel (0) target = $region5
    $region4: #{net_forward.1} parent=1 // pred_region
      _
    $region5: #{net_forward.1} parent=1 // pred_fallthru
      _
    // Predicated region
    $region6: #{net_forward.1} parent=1 // pred_check
      _
    $region7: #{net_forward.1} parent=1 // pred_check_branch
      %11 = sbr.rel (0) target = $region9
    $region8: #{net_forward.1} parent=1 // pred_region
      %13 = vsyncadd [#allocation3], 0
      %s14 = sshll.u32 %s1, 4
      %s15 = int_to_ptr.hbm [resolvable:$true] %s14
      %s16 = sshll.u32 [#allocation2], 4
      %s17 = int_to_ptr.vmem [resolvable:$true] %s16
      %22 = dma.hbm_to_vmem [thread:$0]  %s15, 2432, %s17, [#allocation3], 128, 128, 8
    $region9: #{net_forward.1} parent=1 // pred_fallthru
      _
    // Predicated region
    $region10: #{net_forward.1} parent=1 // pred_check
      _
    $region11: #{net_forward.1} parent=1 // pred_check_branch
      %24 = sbr.rel (0) target = $region13
    $region12: #{net_forward.1} parent=1 // pred_region
      %26 = dma.done [#allocation3], 2432
    $region13: #{net_forward.1} parent=1 // pred_fallthru
      _
    %v27 = vld [vmem:[%s0] sm:$0xff]
    %v28 = vld [vmem:[%s0 + $0x8] sm:$0xff]
    %v29 = vld [vmem:[%s0 + $0x10] sm:$0xff]
    %v30 = vld [vmem:[%s0 + $0x18] sm:$0xff]
    %v31 = vld [vmem:[#allocation2] sm:$0xf]
    %v32 = vld [vmem:[#allocation2 + $0x8] sm:$0x1]
    %v33 = vld [vmem:[#allocation2 + $0x10] sm:$0xff]
    %v34 = vld [vmem:[#allocation2 + $0x18] sm:$0xff]
    %v35 = vld [vmem:[#allocation2 + $0x20] sm:$0xff]
    %v36 = vld [vmem:[#allocation2 + $0x28] sm:$0xff]
    %v37 = vld [vmem:[#allocation2 + $0x30] sm:$0xff]
    %v38 = vld [vmem:[#allocation2 + $0x38] sm:$0xff]
    %v39 = vld [vmem:[#allocation2 + $0x40] sm:$0xff]
    %v40 = vld [vmem:[#allocation2 + $0x48] sm:$0xff]
    %v41 = vld [vmem:[#allocation2 + $0x50] sm:$0xff]
    %v42 = vld [vmem:[#allocation2 + $0x58] sm:$0xff]
    %v43 = vld [vmem:[#allocation2 + $0x60] sm:$0xff]
    %v44 = vld [vmem:[#allocation2 + $0x68] sm:$0xff]
    %v45 = vld [vmem:[#allocation2 + $0x70] sm:$0xff]
    %v46 = vld [vmem:[#allocation2 + $0x78] sm:$0xff]
    %v47 = vld [vmem:[#allocation2 + $0x80] sm:$0xff]
    %v48 = vld [vmem:[#allocation2 + $0x88] sm:$0xff]
    %v49 = vld [vmem:[#allocation2 + $0x90] sm:$0x1]
    %v50 = vperm.slane %v32, 0
    %vm51 = vcmask 31744
    %v53 = vsel %vm51, %v27, 0
    %v56 = vsel %vm51, %v28, 0
    %v59 = vsel %vm51, %v29, 0
    %v62 = vsel %vm51, %v30, 0
    %vm64 = vcmask 1043456
    %v66 = vsel %vm64, %v31, 0
    %68 = vmatpush.msra.mxu0 0.0
    %69 = vmatpush.msra.mxu0 0.0
    %70 = vmatpush.msra.mxu0 0.0
    %71 = vmatpush.msra.mxu0 0.0
    %72 = vmatpush.msra.mxu0 0.0
    %73 = vmatpush.msra.mxu0 0.0
    %74 = vmatpush.msra.mxu0 0.0
    %75 = vmatpush.msra.mxu0 0.0
    %76 = vmatpush.msra.mxu0 0.0
    %77 = vmatpush.msra.mxu0 0.0
    %78 = vmatpush.msra.mxu0 0.0
    %79 = vmatpush.msra.mxu0 0.0
    %80 = vmatpush.msra.mxu0 0.0
    %81 = vmatpush.msra.mxu0 0.0
    %82 = vmatpush.msra.mxu0 0.0
    %83 = vmatpush.msra.mxu0 %v66
    %84 = vmatmul.f32.gmra.mxu0 %v53
    %v85 = vpop.f32.mrf.mxu0
    %v86 = vadd.f32 %v50, %v85
    %87 = vmatmul.f32.gmra.mxu0 %v56
    %v88 = vpop.f32.mrf.mxu0
    %v89 = vadd.f32 %v50, %v88
    %90 = vmatmul.f32.gmra.mxu0 %v59
    %v91 = vpop.f32.mrf.mxu0
    %v92 = vadd.f32 %v50, %v91
    %93 = vmatmul.f32.gmra.mxu0 %v62
    %v94 = vpop.f32.mrf.mxu0
    %v95 = vadd.f32 %v50, %v94
    %96 = vdwg.mxu0
    %v97 = vmax.f32 %v86, 0.0
    %v98 = vmax.f32 %v89, 0.0
    %v99 = vmax.f32 %v92, 0.0
    %v100 = vmax.f32 %v95, 0.0
    %101 = vmatpush.msra.mxu0 %v48
    %102 = vmatpush.msra.mxu0 %v47
    %103 = vmatpush.msra.mxu0 %v46
    %104 = vmatpush.msra.mxu0 %v45
    %105 = vmatpush.msra.mxu0 %v44
    %106 = vmatpush.msra.mxu0 %v43
    %107 = vmatpush.msra.mxu0 %v42
    %108 = vmatpush.msra.mxu0 %v41
    %109 = vmatpush.msra.mxu0 %v40
    %110 = vmatpush.msra.mxu0 %v39
    %111 = vmatpush.msra.mxu0 %v38
    %112 = vmatpush.msra.mxu0 %v37
    %113 = vmatpush.msra.mxu0 %v36
    %114 = vmatpush.msra.mxu0 %v35
    %115 = vmatpush.msra.mxu0 %v34
    %116 = vmatpush.msra.mxu0 %v33
    %117 = vmatmul.f32.gmra.mxu0 %v97
    %v118 = vpop.f32.mrf.mxu0
    %v119 = vadd.f32 0.0, %v118
    %120 = vmatmul.f32.gmra.mxu0 %v98
    %v121 = vpop.f32.mrf.mxu0
    %v122 = vadd.f32 0.0, %v121
    %123 = vmatmul.f32.gmra.mxu0 %v99
    %v124 = vpop.f32.mrf.mxu0
    %v125 = vadd.f32 0.0, %v124
    %126 = vmatmul.f32.gmra.mxu0 %v100
    %v127 = vpop.f32.mrf.mxu0
    %v128 = vadd.f32 0.0, %v127
    %129 = vdwg.mxu0
    %v130 = vperm.slane %v49, 0
    %v131 = vadd.f32 %v119, %v130
    %v132 = vadd.f32 %v122, %v130
    %v133 = vadd.f32 %v125, %v130
    %v134 = vadd.f32 %v128, %v130
    %vm135 = vcmask 15360
    %136 = vst.msk [vmem:[%s2] sm:$0xff] %vm135, %v131
    %137 = vst.msk [vmem:[%s2 + $0x8] sm:$0xff] %vm135, %v132
    %138 = vst.msk [vmem:[%s2 + $0x10] sm:$0xff] %vm135, %v133
    %139 = vst.msk [vmem:[%s2 + $0x18] sm:$0xff] %vm135, %v134
    // Predicated region
    $region14: #{net_forward.1} parent=1 // pred_check
      _
    $region15: #{net_forward.1} parent=1 // pred_check_branch
      %141 = sbr.rel (0) target = $region17
    $region16: #{net_forward.1} parent=1 // pred_region
      _
    $region17: #{net_forward.1} parent=1 // pred_fallthru
      _
    // Predicated region
    $region18: #{net_forward.1} parent=1 // pred_check
      _
    $region19: #{net_forward.1} parent=1 // pred_check_branch
      %143 = sbr.rel (0) target = $region21
    $region20: #{net_forward.1} parent=1 // pred_region
      _
    $region21: #{net_forward.1} parent=1 // pred_fallthru
      _
    %144 = vsyncpa [#allocation3], 1

</llo_original>
